<compile_context>
chip_gen: v7x
topology: tpu7x:2x2x1
jax: 0.10.0
libtpu: 0.0.40
codegen_flags: <defaults>
</compile_context>

<pallas_src>
import jax
import jax.numpy as jnp
from jax import lax
from jax.experimental import pallas as pl
from jax.experimental.pallas import tpu as pltpu

BN_EPS = 1e-5


# ---------------------------------------------------------------------------
# Kernels
# ---------------------------------------------------------------------------
def _make_hidden_kernel(apply_bn_tanh: bool, inv_tile_rows: float):
    """Per batch tile: (optionally BN+tanh the incoming pre-activations using the
    previous layer's full-batch scale/shift) -> Linear on the MXU (bf16 in, f32
    accumulate) -> per-tile BatchNorm statistics for THIS layer's normalization."""

    def _linear_and_stats(x, w_ref, h_ref, stats_ref):
        h = jnp.dot(x.astype(jnp.bfloat16), w_ref[...],
                    preferred_element_type=jnp.float32)              # MXU, f32 acc
        h_ref[...] = h
        # Tile-centered stats (combined across tiles in the wrapper via Chan's
        # parallel-variance formula -> full-batch-exact, cancellation-free).
        mean_t = jnp.sum(h, axis=0, keepdims=True) * inv_tile_rows   # (1, H)
        d = h - mean_t
        m2_t = jnp.sum(d * d, axis=0, keepdims=True)                 # (1, H)
        # TODO(synk): for TM >= 128 compute these reductions on the MXU (ones-row
        # matmul against [h ; h*h]) to offload the 2 XLUs on v6e/v7x.
        stats_ref[:, 0:1, :] = mean_t[None]
        stats_ref[:, 1:2, :] = m2_t[None]

    if apply_bn_tanh:
        def kernel(x_ref, scale_ref, shift_ref, w_ref, h_ref, stats_ref):
            a = jnp.tanh(x_ref[...] * scale_ref[...] + shift_ref[...])
            _linear_and_stats(a, w_ref, h_ref, stats_ref)
    else:
        def kernel(x_ref, w_ref, h_ref, stats_ref):
            _linear_and_stats(x_ref[...], w_ref, h_ref, stats_ref)
    return kernel


def _output_kernel(x_ref, scale_ref, shift_ref, w_ref, b_ref, tgt_ref,
                   preds_ref, rownorm_ref):
    """Per batch tile: BN+tanh of the last hidden pre-activations, output Linear
    (bf16 MXU, f32 acc) + bias, and per-row reconstruction norms for the loss."""
    a = jnp.tanh(x_ref[...] * scale_ref[...] + shift_ref[...])
    preds = jnp.dot(a.astype(jnp.bfloat16), w_ref[...],
                    preferred_element_type=jnp.float32) + b_ref[...]
    preds_ref[...] = preds.astype(preds_ref.dtype)
    diff = preds - tgt_ref[...]
    rownorm_ref[...] = jnp.sqrt(jnp.sum(diff * diff, axis=1, keepdims=True))


# ---------------------------------------------------------------------------
# pallas_call wrappers
# ---------------------------------------------------------------------------
def _pick_batch_tile(batch, requested=None):
    if requested is not None:
        if batch % requested != 0:
            raise ValueError(f"batch {batch} not divisible by batch_tile {requested}")
        return requested
    # Prefer MXU-friendly tiles (256-aligned for v6e/v7x, 128 for v5e).
    for cand in (512, 256, 128, 64, 32, 16, 8):
        if batch % cand == 0:
            return cand
    # TODO(synk): pad + mask ragged batches; for now fall back to a single tile.
    return batch


def _compiler_params(resident_bytes, blocked_bytes):
    # Explicit VMEM budget: double-buffered blocked operands + resident weights,
    # clamped to ~56 MiB so the same configuration fits v7x's 64 MiB VMEM
    # (the same setting raises v5e/v6e's 16/32 MiB scoped defaults when needed).
    vmem = 2 * int(resident_bytes) + 2 * int(blocked_bytes) + (4 << 20)
    vmem = max(8 << 20, min(vmem, 56 << 20))
    return pltpu.CompilerParams(
        dimension_semantics=("parallel",),   # batch tiles are fully independent
        vmem_limit_bytes=vmem)


def _linear_stats_call(x, scale, shift, w_bf16, tile_rows, apply_bn_tanh):
    batch, in_dim = x.shape
    out_dim = w_bf16.shape[1]
    num_tiles = batch // tile_rows
    kernel = _make_hidden_kernel(apply_bn_tanh, 1.0 / tile_rows)

    inputs = [x]
    in_specs = [pl.BlockSpec((tile_rows, in_dim), lambda i: (i, 0))]
    if apply_bn_tanh:
        inputs += [scale, shift]
        in_specs += [pl.BlockSpec((1, in_dim), lambda i: (0, 0)),
                     pl.BlockSpec((1, in_dim), lambda i: (0, 0))]
    inputs.append(w_bf16)
    in_specs.append(pl.BlockSpec((in_dim, out_dim), lambda i: (0, 0)))  # VMEM-resident

    out_shape = (jax.ShapeDtypeStruct((batch, out_dim), jnp.float32),
                 jax.ShapeDtypeStruct((num_tiles, 2, out_dim), jnp.float32))
    out_specs = (pl.BlockSpec((tile_rows, out_dim), lambda i: (i, 0)),
                 pl.BlockSpec((1, 2, out_dim), lambda i: (i, 0, 0)))

    blocked = 4 * tile_rows * (in_dim + out_dim) + 4 * 2 * out_dim
    resident = 2 * in_dim * out_dim + (8 * in_dim if apply_bn_tanh else 0)
    flops = 2 * batch * in_dim * out_dim + 6 * batch * out_dim
    transcendentals = batch * in_dim if apply_bn_tanh else 0
    bytes_accessed = (4 * batch * in_dim + 2 * in_dim * out_dim
                      + 4 * batch * out_dim + 4 * num_tiles * 2 * out_dim
                      + (8 * in_dim if apply_bn_tanh else 0))

    return pl.pallas_call(
        kernel,
        grid=(num_tiles,),
        in_specs=in_specs,
        out_shape=out_shape,
        out_specs=out_specs,
        compiler_params=_compiler_params(resident, blocked),
        cost_estimate=pl.CostEstimate(flops=flops,
                                      transcendentals=transcendentals,
                                      bytes_accessed=bytes_accessed),
    )(*inputs)


def _output_call(h, scale, shift, w_out_bf16, b_out, target, tile_rows):
    batch, in_dim = h.shape
    num_user = w_out_bf16.shape[1]
    num_tiles = batch // tile_rows

    in_specs = [
        pl.BlockSpec((tile_rows, in_dim), lambda i: (i, 0)),
        pl.BlockSpec((1, in_dim), lambda i: (0, 0)),
        pl.BlockSpec((1, in_dim), lambda i: (0, 0)),
        pl.BlockSpec((in_dim, num_user), lambda i: (0, 0)),   # VMEM-resident
        pl.BlockSpec((1, num_user), lambda i: (0, 0)),        # VMEM-resident
        pl.BlockSpec((tile_rows, num_user), lambda i: (i, 0)),
    ]
    out_shape = (jax.ShapeDtypeStruct((batch, num_user), jnp.float32),
                 jax.ShapeDtypeStruct((batch, 1), jnp.float32))
    out_specs = (pl.BlockSpec((tile_rows, num_user), lambda i: (i, 0)),
                 pl.BlockSpec((tile_rows, 1), lambda i: (i, 0)))

    blocked = 4 * tile_rows * (in_dim + 2 * num_user + 1)
    resident = 2 * in_dim * num_user + 4 * num_user + 8 * in_dim
    flops = 2 * batch * in_dim * num_user + 4 * batch * num_user
    transcendentals = batch * in_dim + batch   # tanh + per-row sqrt
    bytes_accessed = (4 * batch * in_dim + 8 * in_dim + 2 * in_dim * num_user
                      + 4 * num_user + 4 * batch * num_user      # target in
                      + 4 * batch * num_user + 4 * batch)        # preds + rownorm out

    return pl.pallas_call(
        _output_kernel,
        grid=(num_tiles,),
        in_specs=in_specs,
        out_shape=out_shape,
        out_specs=out_specs,
        compiler_params=_compiler_params(resident, blocked),
        cost_estimate=pl.CostEstimate(flops=flops,
                                      transcendentals=transcendentals,
                                      bytes_accessed=bytes_accessed),
    )(h, scale, shift, w_out_bf16, b_out, target)


def _combine_tile_stats(stats, tile_rows, batch):
    """Combine per-tile (mean, tile-centered M2) into full-batch mean / biased var
    via Chan's parallel-variance formula (all tiles have `tile_rows` rows)."""
    means = stats[:, 0, :]                                     # (T, H)
    m2s = stats[:, 1, :]                                       # (T, H)
    mean = jnp.mean(means, axis=0)                             # (H,)
    m2 = jnp.sum(m2s, axis=0) + tile_rows * jnp.sum((means - mean[None, :]) ** 2, axis=0)
    var = m2 / batch                                           # biased var (BN training)
    return mean, var


# ---------------------------------------------------------------------------
# Forward pass
# ---------------------------------------------------------------------------
def debiasing_forward(R_input, R_target, params, reg=1e-5, batch_tile=None):
    """Training-mode forward: returns (preds, loss_all, loss_r, reg_loss)."""
    layers = params["layers"]
    if not layers:
        raise ValueError("at least one hidden layer is required")
    batch, _ = R_input.shape
    tile_rows = _pick_batch_tile(batch, batch_tile)

    # Hoisted, batch-independent L2 regularization (plain JAX, computed once).
    reg_loss = jnp.float32(0.0)
    for (W, b, _, _) in layers:
        reg_loss = reg_loss + jnp.sum(W * W) + jnp.sum(b * b)
    reg_loss = reg_loss + jnp.sum(params["W_out"] ** 2) + jnp.sum(params["b_out"] ** 2)
    reg_loss = (reg_loss * jnp.float32(reg)).astype(jnp.float32)

    h = R_input.astype(jnp.float32)
    scale = shift = None
    for idx, (W, _, gamma, beta) in enumerate(layers):
        # Phase 1 of layer `idx`: linear (+ fused BN/tanh of the previous layer) and
        # per-tile stats.  Hidden bias is omitted: training-mode BN cancels it exactly.
        h, stats = _linear_stats_call(h, scale, shift, W.astype(jnp.bfloat16),
                                      tile_rows, apply_bn_tanh=(idx > 0))
        # Phase 2 (tiny, per-feature, plain JAX): full-batch BN affine parameters.
        mean, var = _combine_tile_stats(stats, tile_rows, batch)
        s = gamma.astype(jnp.float32) * lax.rsqrt(var + BN_EPS)
        scale = s.reshape(1, -1)
        shift = (beta.astype(jnp.float32) - mean * s).reshape(1, -1)

    preds, rownorm = _output_call(
        h, scale, shift,
        params["W_out"].astype(jnp.bfloat16),
        params["b_out"].reshape(1, -1).astype(jnp.float32),
        R_target.astype(jnp.float32), tile_rows)

    loss_r = jnp.mean(rownorm)
    loss_all = loss_r + reg_loss
    return preds, loss_all, loss_r, reg_loss


def debiasing_forward_ref(R_input, R_target, params, reg=1e-5):
    """Pure-JAX f32 reference of the same math (sanity check)."""
    x = R_input.astype(jnp.float32)
    reg_loss = jnp.float32(0.0)
    for (W, b, gamma, beta) in params["layers"]:
        h = x @ W + b[None, :]
        mean = jnp.mean(h, axis=0, keepdims=True)
        var = jnp.mean((h - mean) ** 2, axis=0, keepdims=True)
        h = (h - mean) / jnp.sqrt(var + BN_EPS)
        x = jnp.tanh(h * gamma[None, :] + beta[None, :])
        reg_loss = reg_loss + jnp.sum(W * W) + jnp.sum(b * b)
    preds = x @ params["W_out"] + params["b_out"][None, :]
    reg_loss = reg_loss + jnp.sum(params["W_out"] ** 2) + jnp.sum(params["b_out"] ** 2)
    reg_loss = reg_loss * reg
    loss_r = jnp.mean(jnp.sqrt(jnp.sum((preds - R_target) ** 2, axis=1)))
    return preds, loss_r + reg_loss, loss_r, reg_loss


def init_params(key, model_select, num_user):
    """Init matching the module: W ~ N(0, 0.01), b = 0, BN gamma=1, beta=0.
    Weights are stored pre-transposed as (in_features, out_features) so the MXU
    contraction inside the kernels needs no per-call relayout."""
    params = {"layers": []}
    in_dim = num_user
    for hdim in model_select:
        key, k = jax.random.split(key)
        W = 0.01 * jax.random.normal(k, (in_dim, hdim), jnp.float32)
        params["layers"].append((W,
                                 jnp.zeros((hdim,), jnp.float32),
                                 jnp.ones((hdim,), jnp.float32),
                                 jnp.zeros((hdim,), jnp.float32)))
        in_dim = hdim
    key, k = jax.random.split(key)
    params["W_out"] = 0.01 * jax.random.normal(k, (in_dim, num_user), jnp.float32)
    params["b_out"] = jnp.zeros((num_user,), jnp.float32)
    return params


if __name__ == "__main__":
    # Small shapes: num_user = 32, hidden = [64, 32].
    num_user = 32
    model_select = [64, 32]
    reg = 1e-5

    key = jax.random.PRNGKey(0)
    kp, k8i, k8t, k32i, k32t = jax.random.split(key, 5)
    params = init_params(kp, model_select, num_user)

    def check(R_input, R_target, batch_tile=None):
        preds, loss_all, loss_r, reg_loss = debiasing_forward(
            R_input, R_target, params, reg=reg, batch_tile=batch_tile)
        jax.block_until_ready(preds)
        jax.block_until_ready(loss_all)
        # Tolerances cover bf16 MXU inputs (f32 accumulation) vs. the f32 reference.
        p_ref, la_ref, lr_ref, rg_ref = debiasing_forward_ref(
            R_input, R_target, params, reg=reg)
        assert jnp.allclose(preds, p_ref, rtol=5e-2, atol=5e-3), "preds mismatch"
        assert jnp.allclose(loss_all, la_ref, rtol=5e-2, atol=5e-3), "loss_all mismatch"
        assert jnp.allclose(loss_r, lr_ref, rtol=5e-2, atol=5e-3), "loss_r mismatch"
        assert jnp.allclose(reg_loss, rg_ref, rtol=5e-2, atol=1e-6), "reg_loss mismatch"

    # Demo shape: 8 item rows x 32 users (single batch tile).
    check(jax.random.normal(k8i, (8, num_user), jnp.float32),
          jax.random.normal(k8t, (8, num_user), jnp.float32))
    # Exercise the batch-tiled grid (grid=(4,)) with full-batch-exact BatchNorm.
    check(jax.random.normal(k32i, (32, num_user), jnp.float32),
          jax.random.normal(k32t, (32, num_user), jnp.float32), batch_tile=8)

    # TODO(synk): eval-mode branch (torch.topk over preds.t()[user_input]) not
    # implemented — top-k has no clean single-kernel Pallas equivalent; only the
    # training-mode forward is covered.
    print("KERNEL_OK")
</pallas_src>

<mosaic_0001>
module attributes {stable_mosaic.version = 11 : i64} {
  func.func @kernel(%arg0: i32, %arg1: memref<8x32xf32, #tpu.memory_space<vmem>>, %arg2: memref<32x64xbf16, #tpu.memory_space<vmem>>, %arg3: memref<8x64xf32, #tpu.memory_space<vmem>>, %arg4: memref<1x2x64xf32, #tpu.memory_space<vmem>>) attributes {dimension_semantics = [#tpu.dimension_semantics<parallel>], iteration_bounds = array<i64: 1>, scalar_prefetch = 0 : i64, scratch_operands = 0 : i64, tpu.core_type = #tpu.core_type<tc>, window_params = [{transform_indices = @transform_0, window_bounds = array<i64: 8, 32>}, {pipeline_mode = #tpu.pipeline_mode<synchronous>, transform_indices = @transform_1, window_bounds = array<i64: 32, 64>}, {transform_indices = @transform_2, window_bounds = array<i64: 8, 64>}, {transform_indices = @transform_3, window_bounds = array<i64: 1, 2, 64>}]} {
    %c0 = arith.constant 0 : index
    %c0_0 = arith.constant 0 : index
    %0 = vector.load %arg1[%c0, %c0_0] : memref<8x32xf32, #tpu.memory_space<vmem>>, vector<8x32xf32>
    %1 = arith.truncf %0 : vector<8x32xf32> to vector<8x32xbf16>
    %c0_1 = arith.constant 0 : index
    %c0_2 = arith.constant 0 : index
    %2 = vector.load %arg2[%c0_1, %c0_2] : memref<32x64xbf16, #tpu.memory_space<vmem>>, vector<32x64xbf16>
    %cst = arith.constant dense<0.000000e+00> : vector<8x64xf32>
    %3 = tpu.matmul %1, %2, %cst {dimension_numbers = #tpu.dot_dimension_numbers<[1], [0], [0], [1], [0, 0, 1, 1], [], []>} : vector<8x32xbf16>, vector<32x64xbf16>, vector<8x64xf32> -> vector<8x64xf32>
    %c0_3 = arith.constant 0 : index
    %c0_4 = arith.constant 0 : index
    %4 = vector.load %arg3[%c0_3, %c0_4] : memref<8x64xf32, #tpu.memory_space<vmem>>, vector<8x64xf32>
    tpu.vector_store %arg3[%c0_3, %c0_4], %3 {strides = array<i32>} : memref<8x64xf32, #tpu.memory_space<vmem>>, vector<8x64xf32>,
    %cst_5 = arith.constant dense<0.000000e+00> : vector<64xf32>
    %5 = vector.multi_reduction <add>, %3, %cst_5 [0] : vector<8x64xf32> to vector<64xf32>
    %6 = vector.shape_cast %5 : vector<64xf32> to vector<1x64xf32>
    %cst_6 = arith.constant 1.250000e-01 : f32
    %7 = vector.broadcast %cst_6 : f32 to vector<1x64xf32>
    %8 = arith.mulf %6, %7 : vector<1x64xf32>
    %9 = vector.broadcast %8 : vector<1x64xf32> to vector<8x64xf32>
    %10 = arith.subf %3, %9 : vector<8x64xf32>
    %11 = arith.mulf %10, %10 : vector<8x64xf32>
    %cst_7 = arith.constant dense<0.000000e+00> : vector<64xf32>
    %12 = vector.multi_reduction <add>, %11, %cst_7 [0] : vector<8x64xf32> to vector<64xf32>
    %13 = vector.shape_cast %12 : vector<64xf32> to vector<1x64xf32>
    %14 = vector.shape_cast %8 : vector<1x64xf32> to vector<1x1x64xf32>
    %c0_8 = arith.constant 0 : index
    %c0_9 = arith.constant 0 : index
    %c0_10 = arith.constant 0 : index
    %15 = vector.load %arg4[%c0_8, %c0_9, %c0_10] : memref<1x2x64xf32, #tpu.memory_space<vmem>>, vector<1x1x64xf32>
    tpu.vector_store %arg4[%c0_8, %c0_9, %c0_10], %14 {strides = array<i32>} : memref<1x2x64xf32, #tpu.memory_space<vmem>>, vector<1x1x64xf32>,
    %16 = vector.shape_cast %13 : vector<1x64xf32> to vector<1x1x64xf32>
    %c0_11 = arith.constant 0 : index
    %c1 = arith.constant 1 : index
    %c0_12 = arith.constant 0 : index
    %17 = vector.load %arg4[%c0_11, %c1, %c0_12] : memref<1x2x64xf32, #tpu.memory_space<vmem>>, vector<1x1x64xf32>
    tpu.vector_store %arg4[%c0_11, %c1, %c0_12], %16 {strides = array<i32>} : memref<1x2x64xf32, #tpu.memory_space<vmem>>, vector<1x1x64xf32>,
    return
  }
  func.func @transform_0(%arg0: i32) -> (i32, i32) {
    %c0_i32 = arith.constant 0 : i32
    %c0_i32_0 = arith.constant 0 : i32
    return %arg0, %c0_i32 : i32, i32
  }
  func.func @transform_1(%arg0: i32) -> (i32, i32) {
    %c0_i32 = arith.constant 0 : i32
    %c0_i32_0 = arith.constant 0 : i32
    %c0_i32_1 = arith.constant 0 : i32
    return %c0_i32, %c0_i32_0 : i32, i32
  }
  func.func @transform_2(%arg0: i32) -> (i32, i32) {
    %c0_i32 = arith.constant 0 : i32
    %c0_i32_0 = arith.constant 0 : i32
    return %arg0, %c0_i32 : i32, i32
  }
  func.func @transform_3(%arg0: i32) -> (i32, i32, i32) {
    %c0_i32 = arith.constant 0 : i32
    %c0_i32_0 = arith.constant 0 : i32
    %c0_i32_1 = arith.constant 0 : i32
    return %arg0, %c0_i32, %c0_i32_0 : i32, i32, i32
  }
}

</mosaic_0001>

<llo_original>
// kernel: tpu_custom_call.1
$region0: #{tpu_custom_call.1}
  #allocation0 [shape = 'u32[]', space=smem, size = 0x4, offset = 0x4, fixed_abs, tag = 'smem constant byte address 0x4 - core index']
  #allocation1 [shape = 'u32[144,128]{1,0:T(1,128)}', space=vmem, size = 0x12000, scoped, tag = 'internal scratch']
  %s0 = inlined_call_operand.hbm [shape: f32[8,32], index: 0, kind: input, shape index: {}]
  %s1 = inlined_call_operand.hbm [shape: bf16[32,64], index: 1, kind: input, shape index: {}]
  %s2 = inlined_call_operand.hbm [shape: f32[8,64], index: 2, kind: output, shape index: {0}]
  %s3 = inlined_call_operand.hbm [shape: f32[1,2,64], index: 3, kind: output, shape index: {1}]
  %4 = xla_tuple %s2, %s3
  %s5 = sld [smem:[#allocation0]]
  $region34: #{tpu_custom_call.1} parent=0
    _
  %s7 = ssub.s32 1, %s5
  %s8 = scalar_select 0, %s7, %s5
  $region1: #{tpu_custom_call.1} parent=0
    #allocation2 [shape = 'u8[4096]{0}', space=vmem, size = 0x1000, scoped, tag = 'input window, operand 0, single buffered']
    #allocation3 [shape = 's32[1]{0}', space=sflag, size = 0x4, scoped, tag = 'scoped memory for tpu_custom_call.1']
    #allocation4 [shape = 's32[1]{0}', space=sflag, size = 0x4, scoped, tag = 'scoped memory for tpu_custom_call.1']
    #allocation5 [shape = 'u8[8192]{0}', space=vmem, size = 0x2000, scoped, tag = 'input window, operand 1, single buffered']
    #allocation6 [shape = 's32[1]{0}', space=sflag, size = 0x4, scoped, tag = 'scoped memory for tpu_custom_call.1']
    #allocation7 [shape = 'u8[4096]{0}', space=vmem, size = 0x1000, scoped, tag = 'output window, operand 0, single buffered']
    #allocation8 [shape = 'u8[1024]{0}', space=vmem, size = 0x400, scoped, tag = 'output window, operand 1, single buffered']
    #allocation9 [shape = 's32[1]{0}', space=sflag, size = 0x4, scoped, tag = 'scoped memory for tpu_custom_call.1']
    %9 = vsyncpa [#allocation3], 0
    %10 = vsyncpa [#allocation6], 0
    %11 = vsyncpa [#allocation4], 0
    %12 = vsyncpa [#allocation9], 0
    // Predicated region
    $region2: #{tpu_custom_call.1} parent=1 // pred_check
      _
    $region3: #{tpu_custom_call.1} parent=1 // pred_check_branch
      %14 = sbr.rel (0) target = $region5
    $region4: #{tpu_custom_call.1} parent=1 // pred_region
      %s16 = ssub.s32 128, 128
      %17 = vsyncadd [#allocation3], %s16
      %s19 = sshll.u32 [#allocation2], 4
      %s20 = int_to_ptr.vmem [resolvable:$true] %s19
      %22 = dma.hbm_to_vmem [thread:$0]  %s0, 128, %s20, [#allocation3]
    $region5: #{tpu_custom_call.1} parent=1 // pred_fallthru
      _
    // Predicated region
    $region6: #{tpu_custom_call.1} parent=1 // pred_check
      _
    $region7: #{tpu_custom_call.1} parent=1 // pred_check_branch
      %24 = sbr.rel (0) target = $region9
    $region8: #{tpu_custom_call.1} parent=1 // pred_region
      %s26 = ssub.s32 256, 256
      %27 = vsyncadd [#allocation6], %s26
      %s28 = sshll.u32 [#allocation5], 4
      %s29 = int_to_ptr.vmem [resolvable:$true] %s28
      %34 = dma.hbm_to_vmem [thread:$0]  %s1, 256, %s29, [#allocation6], 64, 64, 4
    $region9: #{tpu_custom_call.1} parent=1 // pred_fallthru
      _
    // Predicated region
    $region10: #{tpu_custom_call.1} parent=1 // pred_check
      _
    $region11: #{tpu_custom_call.1} parent=1 // pred_check_branch
      %36 = sbr.rel (0) target = $region13
    $region12: #{tpu_custom_call.1} parent=1 // pred_region
      %37 = dma.done [#allocation3], 128
    $region13: #{tpu_custom_call.1} parent=1 // pred_fallthru
      _
    // Predicated region
    $region14: #{tpu_custom_call.1} parent=1 // pred_check
      _
    $region15: #{tpu_custom_call.1} parent=1 // pred_check_branch
      %39 = sbr.rel (0) target = $region17
    $region16: #{tpu_custom_call.1} parent=1 // pred_region
      %40 = dma.done [#allocation6], 256
    $region17: #{tpu_custom_call.1} parent=1 // pred_fallthru
      _
    %v42 = vld [vmem:[#allocation2] sm:$0xff]
    %v43 = vpack.c.bf16 %v42, %v42
    %v44 = vld [vmem:[#allocation5] sm:$0xf]
    %v45 = vld [vmem:[#allocation5 + $0x4] sm:$0xf]
    %v46 = vld [vmem:[#allocation5 + $0x8] sm:$0xf]
    %v47 = vld [vmem:[#allocation5 + $0xc] sm:$0xf]
    %v52 = vunpack.c.l.b16 %v44
    %v53 = vunpack.c.l.b16 %v45
    %v54 = vunpack.c.l.b16 %v46
    %v55 = vunpack.c.l.b16 %v47
    %v56 = vpack.c.b16 %v53, %v52
    %v57 = vpack.c.b16 %v55, %v54
    %vm60 = vcmask 261120
    %v62 = vsel %vm60, %v43, 0
    %64 = vmatprep.subr.bf16.mxu0 0
    %65 = vmatpush1.bf16.msra.mxu0 %v56
    %66 = vmatprep.subr.bf16.mxu0 0
    %67 = vmatpush1.bf16.msra.mxu0 %v57
    %68 = vmatprep.subr.bf16.mxu0 0
    %69 = vmatpush1.bf16.msra.mxu0 0
    %70 = vmatprep.subr.bf16.mxu0 0
    %71 = vmatpush1.bf16.msra.mxu0 0
    %72 = vmatprep.subr.bf16.mxu0 0
    %73 = vmatpush1.bf16.msra.mxu0 0
    %74 = vmatprep.subr.bf16.mxu0 0
    %75 = vmatpush1.bf16.msra.mxu0 0
    %76 = vmatprep.subr.bf16.mxu0 0
    %77 = vmatpush1.bf16.msra.mxu0 0
    %78 = vmatprep.subr.bf16.mxu0 0
    %79 = vmatpush1.bf16.msra.mxu0 0
    %80 = vmatprep.subr.bf16.mxu0 0
    %81 = vmatpush1.bf16.msra.mxu0 0
    %82 = vmatprep.subr.bf16.mxu0 0
    %83 = vmatpush1.bf16.msra.mxu0 0
    %84 = vmatprep.subr.bf16.mxu0 0
    %85 = vmatpush1.bf16.msra.mxu0 0
    %86 = vmatprep.subr.bf16.mxu0 0
    %87 = vmatpush1.bf16.msra.mxu0 0
    %88 = vmatprep.subr.bf16.mxu0 0
    %89 = vmatpush1.bf16.msra.mxu0 0
    %90 = vmatprep.subr.bf16.mxu0 0
    %91 = vmatpush1.bf16.msra.mxu0 0
    %92 = vmatprep.subr.bf16.mxu0 0
    %93 = vmatpush1.bf16.msra.mxu0 0
    %94 = vmatprep.subr.bf16.mxu0 0
    %95 = vmatpush1.bf16.msra.mxu0 0
    %96 = vmatprep.mubr.bf16.mxu0 0
    %97 = vmatmul.mubr.bf16.gmra.mrb[0].mxu0 %v62
    %v98 = vpop.f32.mrb[0].mxu0
    %v99 = vadd.f32 0.0, %v98
    %v100 = vpop.f32.mrb[0].mxu0
    %v101 = vpop.f32.mrb[0].mxu0
    %v102 = vpop.f32.mrb[0].mxu0
    %103 = vdwg.mxu0
    %vm104 = vcmask 523264
    %105 = vst.msk [vmem:[#allocation7] sm:$0xff] %vm104, %v99
    %v106 = vsel %vm104, %v99, 0.0
    %v107 = vrot.slane %v106, 4
    %v108 = vadd.f32 %v106, %v107
    %v109 = vrot.slane %v108, 2
    %v110 = vadd.f32 %v108, %v109
    %v111 = vrot.slane %v110, 1
    %v112 = vadd.f32 %v110, %v111
    %v113 = vmul.f32 %v112, 0.125
    %v114 = vsub.f32 %v99, %v113
    %v115 = vmul.f32 %v114, %v114
    %v116 = vsel %vm104, %v115, 0.0
    %v117 = vrot.slane %v116, 4
    %v118 = vadd.f32 %v116, %v117
    %v119 = vrot.slane %v118, 2
    %v120 = vadd.f32 %v118, %v119
    %v121 = vrot.slane %v120, 1
    %v122 = vadd.f32 %v120, %v121
    %vm123 = vcmask 516096
    %124 = vst.msk [vmem:[#allocation8] sm:$0x1] %vm123, %v113
    %125 = vst.msk [vmem:[#allocation8 + $0x1] sm:$0x1] %vm123, %v122
    // Predicated region
    $region18: #{tpu_custom_call.1} parent=1 // pred_check
      _
    $region19: #{tpu_custom_call.1} parent=1 // pred_check_branch
      %127 = sbr.rel (0) target = $region21
    $region20: #{tpu_custom_call.1} parent=1 // pred_region
      %s129 = ssub.s32 128, 128
      %130 = vsyncadd [#allocation4], %s129
      %s132 = sshll.u32 [#allocation7], 4
      %s133 = int_to_ptr.vmem [resolvable:$true] %s132
      %135 = dma.vmem_to_hbm [thread:$0]  %s133, 128, %s2, [#allocation4]
    $region21: #{tpu_custom_call.1} parent=1 // pred_fallthru
      _
    // Predicated region
    $region22: #{tpu_custom_call.1} parent=1 // pred_check
      _
    $region23: #{tpu_custom_call.1} parent=1 // pred_check_branch
      %137 = sbr.rel (0) target = $region25
    $region24: #{tpu_custom_call.1} parent=1 // pred_region
      %s139 = ssub.s32 32, 32
      %140 = vsyncadd [#allocation9], %s139
      %s142 = sshll.u32 [#allocation8], 4
      %s143 = int_to_ptr.vmem [resolvable:$true] %s142
      %145 = dma.vmem_to_hbm [thread:$0]  %s143, 32, %s3, [#allocation9]
    $region25: #{tpu_custom_call.1} parent=1 // pred_fallthru
      _
    // Predicated region
    $region26: #{tpu_custom_call.1} parent=1 // pred_check
      _
    $region27: #{tpu_custom_call.1} parent=1 // pred_check_branch
      %147 = sbr.rel (0) target = $region29
    $region28: #{tpu_custom_call.1} parent=1 // pred_region
      %148 = dma.done [#allocation4], 128
    $region29: #{tpu_custom_call.1} parent=1 // pred_fallthru
      _
    // Predicated region
    $region30: #{tpu_custom_call.1} parent=1 // pred_check
      _
    $region31: #{tpu_custom_call.1} parent=1 // pred_check_branch
      %150 = sbr.rel (0) target = $region33
    $region32: #{tpu_custom_call.1} parent=1 // pred_region
      %151 = dma.done [#allocation9], 32
    $region33: #{tpu_custom_call.1} parent=1 // pred_fallthru
      _
    %152 = vsyncpa [#allocation3], 1
    %153 = vsyncpa [#allocation6], 1
    %154 = vsyncpa [#allocation4], 1
    %155 = vsyncpa [#allocation9], 1

</llo_original>
